<compile_context>
chip_gen: v6e
topology: v6e:2x2x1
jax: 0.10.0
libtpu: 0.0.40
codegen_flags: <defaults>
</compile_context>

<pallas_src>
import jax
import jax.numpy as jnp
from jax.experimental import pallas as pl
from jax.experimental.pallas import tpu as pltpu


def _mlp_kernel(xt_ref, w1_ref, b1_ref, w2_ref, b2_ref, qt_ref):
    # (H, I) @ (I, tb) -> (H, tb); f32 accumulation on the MXU.
    h = jnp.dot(w1_ref[...], xt_ref[...], preferred_element_type=jnp.float32)
    h = jnp.maximum(h + b1_ref[...], 0.0)
    # (O, H) @ (H, tb) -> (O, tb); activations stay f32 (no bf16 round-trip).
    q = jnp.dot(w2_ref[...], h, preferred_element_type=jnp.float32)
    qt_ref[...] = (q + b2_ref[...]).astype(qt_ref.dtype)


def _mlp_act_kernel(xt_ref, w1_ref, b1_ref, w2_ref, b2_ref, v_ref, a_ref):
    # Same MLP, plus max/argmax over the tiny sublane-resident action axis fused
    # into the epilogue -> lane-dense (1, tb) outputs, 4x fewer output bytes.
    h = jnp.dot(w1_ref[...], xt_ref[...], preferred_element_type=jnp.float32)
    h = jnp.maximum(h + b1_ref[...], 0.0)
    q = jnp.dot(w2_ref[...], h, preferred_element_type=jnp.float32) + b2_ref[...]
    v = jnp.max(q, axis=0, keepdims=True)                        # (1, tb)
    idx = jax.lax.broadcasted_iota(jnp.int32, q.shape, 0)        # action ids
    a = jnp.min(jnp.where(q == v, idx, q.shape[0]), axis=0, keepdims=True)
    v_ref[...] = v.astype(v_ref.dtype)
    a_ref[...] = a.astype(a_ref.dtype)


def _batch_tile(b, tile_b):
    """Lane (batch) tile: full batch for small B, otherwise a multiple of 128,
    capped so the grid has >= 2 steps (keeps both v7x TensorCores busy)."""
    if b <= 256:
        return b                       # single full-extent block (always legal)
    tb = max(128, (min(tile_b, b) // 128) * 128)
    half = ((b + 1) // 2 + 127) // 128 * 128
    return min(tb, half)


def _in_specs(I, H, O, tb):
    return [
        pl.BlockSpec((I, tb), lambda i: (0, i)),   # x^T: batch on the lane axis
        pl.BlockSpec((H, I), lambda i: (0, 0)),    # weights stay VMEM-resident
        pl.BlockSpec((H, 1), lambda i: (0, 0)),
        pl.BlockSpec((O, H), lambda i: (0, 0)),
        pl.BlockSpec((O, 1), lambda i: (0, 0)),
    ]


def _prep(x, b1, b2, H, O):
    xt = x.astype(jnp.float32).T                   # (I, B)
    b1c = b1.astype(jnp.float32).reshape(H, 1)
    b2c = b2.astype(jnp.float32).reshape(O, 1)
    return xt, b1c, b2c


def dqn_net_forward(x, w1, b1, w2, b2, *, tile_b=2048):
    """Fused DQNNet forward: relu(x @ w1.T + b1) @ w2.T + b2.

    Torch-native parameter layout: w1:(H, I), b1:(H,), w2:(O, H), b2:(O,).
    x:(B, I) -> (B, O) Q-values in x.dtype.
    """
    B, I = x.shape
    H, O = w1.shape[0], w2.shape[0]
    tb = _batch_tile(B, tile_b)
    xt, b1c, b2c = _prep(x, b1, b2, H, O)

    qt = pl.pallas_call(
        _mlp_kernel,
        out_shape=jax.ShapeDtypeStruct((O, B), x.dtype),
        grid_spec=pltpu.PrefetchScalarGridSpec(
            num_scalar_prefetch=0,
            grid=(pl.cdiv(B, tb),),
            in_specs=_in_specs(I, H, O, tb),
            out_specs=pl.BlockSpec((O, tb), lambda i: (0, i)),   # lane-dense out
        ),
        compiler_params=pltpu.CompilerParams(
            dimension_semantics=("parallel",),
        ),
    )(xt, w1.astype(jnp.float32), b1c, w2.astype(jnp.float32), b2c)
    return qt.T                                    # (B, O)


def dqn_net_act(x, w1, b1, w2, b2, *, tile_b=2048):
    """Fused act path: returns (max Q-value:(B,), greedy action:(B,) int32)."""
    B, I = x.shape
    H, O = w1.shape[0], w2.shape[0]
    tb = _batch_tile(B, tile_b)
    xt, b1c, b2c = _prep(x, b1, b2, H, O)

    value, action = pl.pallas_call(
        _mlp_act_kernel,
        out_shape=(jax.ShapeDtypeStruct((1, B), jnp.float32),
                   jax.ShapeDtypeStruct((1, B), jnp.int32)),
        grid_spec=pltpu.PrefetchScalarGridSpec(
            num_scalar_prefetch=0,
            grid=(pl.cdiv(B, tb),),
            in_specs=_in_specs(I, H, O, tb),
            out_specs=[pl.BlockSpec((1, tb), lambda i: (0, i)),
                       pl.BlockSpec((1, tb), lambda i: (0, i))],
        ),
        compiler_params=pltpu.CompilerParams(
            dimension_semantics=("parallel",),
        ),
    )(xt, w1.astype(jnp.float32), b1c, w2.astype(jnp.float32), b2c)
    return value[0], action[0]


def init_dqn_params(key, input_size, hidden_size, output_size, dtype=jnp.float32):
    """torch.nn.Linear-style init, torch-native (out_features, in_features) layout."""
    k1, k2, k3, k4 = jax.random.split(key, 4)
    lim1 = 1.0 / (input_size ** 0.5)
    lim2 = 1.0 / (hidden_size ** 0.5)
    w1 = jax.random.uniform(k1, (hidden_size, input_size), dtype, -lim1, lim1)
    b1 = jax.random.uniform(k2, (hidden_size,), dtype, -lim1, lim1)
    w2 = jax.random.uniform(k3, (output_size, hidden_size), dtype, -lim2, lim2)
    b2 = jax.random.uniform(k4, (output_size,), dtype, -lim2, lim2)
    return w1, b1, w2, b2


def _ref(x, w1, b1, w2, b2):
    h = jnp.maximum(x @ w1.T + b1, 0.0)
    return h @ w2.T + b2


if __name__ == "__main__":
    key = jax.random.PRNGKey(0)
    kx, kp, kb = jax.random.split(key, 3)

    # Small DQN shapes (e.g. CartPole-ish): B=8, I=16, H=32, O=4 actions.
    batch, input_size, hidden_size, output_size = 8, 16, 32, 4
    x = jax.random.normal(kx, (batch, input_size), dtype=jnp.float32)
    params = init_dqn_params(kp, input_size, hidden_size, output_size)

    q = jax.block_until_ready(dqn_net_forward(x, *params))
    assert q.shape == (batch, output_size)
    assert jnp.allclose(q, _ref(x, *params), atol=2e-2, rtol=2e-2)

    # Batched replay path: non-multiple-of-128 batch exercises the cdiv grid
    # and partial last block (tb=512, grid=2), still no pad/slice in the wrapper.
    big_b = 1000
    xb = jax.random.normal(kb, (big_b, input_size), dtype=jnp.float32)
    qb = jax.block_until_ready(dqn_net_forward(xb, *params))
    assert qb.shape == (big_b, output_size)
    assert jnp.allclose(qb, _ref(xb, *params), atol=2e-2, rtol=2e-2)

    # Fused act path: compare against the kernel's own Q-values (argmax checked
    # only where the top-2 gap is clear, to stay robust to float ties).
    v, a = dqn_net_act(xb, *params)
    v, a = jax.block_until_ready((v, a))
    assert v.shape == (big_b,) and a.shape == (big_b,)
    assert jnp.allclose(v, qb.max(axis=1), atol=1e-5, rtol=1e-5)
    q_sorted = jnp.sort(qb, axis=1)
    clear = (q_sorted[:, -1] - q_sorted[:, -2]) > 1e-4
    assert bool(jnp.all((a == jnp.argmax(qb, axis=1)) | ~clear))

    print("KERNEL_OK")
</pallas_src>

<mosaic_0001>
module attributes {stable_mosaic.version = 11 : i64} {
  func.func @_mlp_kernel(%arg0: i32, %arg1: memref<16x8xf32, #tpu.memory_space<vmem>>, %arg2: memref<32x16xf32, #tpu.memory_space<vmem>>, %arg3: memref<32x1xf32, #tpu.memory_space<vmem>>, %arg4: memref<4x32xf32, #tpu.memory_space<vmem>>, %arg5: memref<4x1xf32, #tpu.memory_space<vmem>>, %arg6: memref<4x8xf32, #tpu.memory_space<vmem>>) attributes {dimension_semantics = [#tpu.dimension_semantics<parallel>], iteration_bounds = array<i64: 1>, scalar_prefetch = 0 : i64, scratch_operands = 0 : i64, tpu.core_type = #tpu.core_type<tc>, window_params = [{transform_indices = @transform_0, window_bounds = array<i64: 16, 8>}, {pipeline_mode = #tpu.pipeline_mode<synchronous>, transform_indices = @transform_1, window_bounds = array<i64: 32, 16>}, {pipeline_mode = #tpu.pipeline_mode<synchronous>, transform_indices = @transform_2, window_bounds = array<i64: 32, 1>}, {pipeline_mode = #tpu.pipeline_mode<synchronous>, transform_indices = @transform_3, window_bounds = array<i64: 4, 32>}, {pipeline_mode = #tpu.pipeline_mode<synchronous>, transform_indices = @transform_4, window_bounds = array<i64: 4, 1>}, {transform_indices = @transform_5, window_bounds = array<i64: 4, 8>}]} {
    %c0 = arith.constant 0 : index
    %c0_0 = arith.constant 0 : index
    %0 = vector.load %arg2[%c0, %c0_0] : memref<32x16xf32, #tpu.memory_space<vmem>>, vector<32x16xf32>
    %c0_1 = arith.constant 0 : index
    %c0_2 = arith.constant 0 : index
    %1 = vector.load %arg1[%c0_1, %c0_2] : memref<16x8xf32, #tpu.memory_space<vmem>>, vector<16x8xf32>
    %cst = arith.constant dense<0.000000e+00> : vector<32x8xf32>
    %2 = tpu.matmul %0, %1, %cst {dimension_numbers = #tpu.dot_dimension_numbers<[1], [0], [0], [1], [0, 0, 1, 1], [], []>} : vector<32x16xf32>, vector<16x8xf32>, vector<32x8xf32> -> vector<32x8xf32>
    %c0_3 = arith.constant 0 : index
    %c0_4 = arith.constant 0 : index
    %3 = vector.load %arg3[%c0_3, %c0_4] : memref<32x1xf32, #tpu.memory_space<vmem>>, vector<32x1xf32>
    %4 = vector.broadcast %3 : vector<32x1xf32> to vector<32x8xf32>
    %5 = arith.addf %2, %4 : vector<32x8xf32>
    %cst_5 = arith.constant 0.000000e+00 : f32
    %6 = vector.broadcast %cst_5 : f32 to vector<32x8xf32>
    %7 = arith.maximumf %5, %6 : vector<32x8xf32>
    %c0_6 = arith.constant 0 : index
    %c0_7 = arith.constant 0 : index
    %8 = vector.load %arg4[%c0_6, %c0_7] : memref<4x32xf32, #tpu.memory_space<vmem>>, vector<4x32xf32>
    %cst_8 = arith.constant dense<0.000000e+00> : vector<4x8xf32>
    %9 = tpu.matmul %8, %7, %cst_8 {dimension_numbers = #tpu.dot_dimension_numbers<[1], [0], [0], [1], [0, 0, 1, 1], [], []>} : vector<4x32xf32>, vector<32x8xf32>, vector<4x8xf32> -> vector<4x8xf32>
    %c0_9 = arith.constant 0 : index
    %c0_10 = arith.constant 0 : index
    %10 = vector.load %arg5[%c0_9, %c0_10] : memref<4x1xf32, #tpu.memory_space<vmem>>, vector<4x1xf32>
    %11 = vector.broadcast %10 : vector<4x1xf32> to vector<4x8xf32>
    %12 = arith.addf %9, %11 : vector<4x8xf32>
    %c0_11 = arith.constant 0 : index
    %c0_12 = arith.constant 0 : index
    %13 = vector.load %arg6[%c0_11, %c0_12] : memref<4x8xf32, #tpu.memory_space<vmem>>, vector<4x8xf32>
    tpu.vector_store %arg6[%c0_11, %c0_12], %12 {strides = array<i32>} : memref<4x8xf32, #tpu.memory_space<vmem>>, vector<4x8xf32>,
    return
  }
  func.func @transform_0(%arg0: i32) -> (i32, i32) {
    %c0_i32 = arith.constant 0 : i32
    %c0_i32_0 = arith.constant 0 : i32
    return %c0_i32, %arg0 : i32, i32
  }
  func.func @transform_1(%arg0: i32) -> (i32, i32) {
    %c0_i32 = arith.constant 0 : i32
    %c0_i32_0 = arith.constant 0 : i32
    %c0_i32_1 = arith.constant 0 : i32
    return %c0_i32, %c0_i32_0 : i32, i32
  }
  func.func @transform_2(%arg0: i32) -> (i32, i32) {
    %c0_i32 = arith.constant 0 : i32
    %c0_i32_0 = arith.constant 0 : i32
    %c0_i32_1 = arith.constant 0 : i32
    return %c0_i32, %c0_i32_0 : i32, i32
  }
  func.func @transform_3(%arg0: i32) -> (i32, i32) {
    %c0_i32 = arith.constant 0 : i32
    %c0_i32_0 = arith.constant 0 : i32
    %c0_i32_1 = arith.constant 0 : i32
    return %c0_i32, %c0_i32_0 : i32, i32
  }
  func.func @transform_4(%arg0: i32) -> (i32, i32) {
    %c0_i32 = arith.constant 0 : i32
    %c0_i32_0 = arith.constant 0 : i32
    %c0_i32_1 = arith.constant 0 : i32
    return %c0_i32, %c0_i32_0 : i32, i32
  }
  func.func @transform_5(%arg0: i32) -> (i32, i32) {
    %c0_i32 = arith.constant 0 : i32
    %c0_i32_0 = arith.constant 0 : i32
    return %c0_i32, %arg0 : i32, i32
  }
}

</mosaic_0001>

<llo_original>
// kernel: tpu_custom_call.1
$region0: #{tpu_custom_call.1}
  #allocation0 [shape = 'u32[]', space=smem, size = 0x4, offset = 0x4, fixed_abs, tag = 'smem constant byte address 0x4 - core index']
  #allocation1 [shape = 'u32[144,128]{1,0:T(1,128)}', space=vmem, size = 0x12000, scoped, tag = 'internal scratch']
  %s0 = inlined_call_operand.vmem [shape: f32[16,8], index: 0, kind: input, shape index: {}]
  %s1 = inlined_call_operand.vmem [shape: f32[32,16], index: 1, kind: input, shape index: {}]
  %s2 = inlined_call_operand.vmem [shape: f32[32,1], index: 2, kind: input, shape index: {}]
  %s3 = inlined_call_operand.vmem [shape: f32[4,32], index: 3, kind: input, shape index: {}]
  %s4 = inlined_call_operand.vmem [shape: f32[4,1], index: 4, kind: input, shape index: {}]
  %s5 = inlined_call_operand.hbm [shape: f32[4,8], index: 5, kind: output, shape index: {}]
  %s6 = sld [smem:[#allocation0]]
  $region30: #{tpu_custom_call.1} parent=0
    _
  %s8 = ssub.s32 1, %s6
  %s9 = scalar_select 0, %s8, %s6
  $region1: #{tpu_custom_call.1} parent=0
    #allocation2 [shape = 'u8[2048]{0}', space=vmem, size = 0x800, scoped, tag = 'output window, operand 0, single buffered']
    #allocation3 [shape = 's32[1]{0}', space=sflag, size = 0x4, scoped, tag = 'scoped memory for tpu_custom_call.1']
    %10 = vsyncpa [#allocation3], 0
    // Predicated region
    $region2: #{tpu_custom_call.1} parent=1 // pred_check
      _
    $region3: #{tpu_custom_call.1} parent=1 // pred_check_branch
      %12 = sbr.rel (0) target = $region5
    $region4: #{tpu_custom_call.1} parent=1 // pred_region
      _
    $region5: #{tpu_custom_call.1} parent=1 // pred_fallthru
      _
    // Predicated region
    $region6: #{tpu_custom_call.1} parent=1 // pred_check
      _
    $region7: #{tpu_custom_call.1} parent=1 // pred_check_branch
      %14 = sbr.rel (0) target = $region9
    $region8: #{tpu_custom_call.1} parent=1 // pred_region
      _
    $region9: #{tpu_custom_call.1} parent=1 // pred_fallthru
      _
    // Predicated region
    $region10: #{tpu_custom_call.1} parent=1 // pred_check
      _
    $region11: #{tpu_custom_call.1} parent=1 // pred_check_branch
      %16 = sbr.rel (0) target = $region13
    $region12: #{tpu_custom_call.1} parent=1 // pred_region
      _
    $region13: #{tpu_custom_call.1} parent=1 // pred_fallthru
      _
    // Predicated region
    $region14: #{tpu_custom_call.1} parent=1 // pred_check
      _
    $region15: #{tpu_custom_call.1} parent=1 // pred_check_branch
      %18 = sbr.rel (0) target = $region17
    $region16: #{tpu_custom_call.1} parent=1 // pred_region
      _
    $region17: #{tpu_custom_call.1} parent=1 // pred_fallthru
      _
    // Predicated region
    $region18: #{tpu_custom_call.1} parent=1 // pred_check
      _
    $region19: #{tpu_custom_call.1} parent=1 // pred_check_branch
      %20 = sbr.rel (0) target = $region21
    $region20: #{tpu_custom_call.1} parent=1 // pred_region
      _
    $region21: #{tpu_custom_call.1} parent=1 // pred_fallthru
      _
    %v21 = vld [vmem:[%s1] sm:$0xff]
    %v22 = vld [vmem:[%s1 + $0x8] sm:$0xff]
    %v23 = vld [vmem:[%s1 + $0x10] sm:$0xff]
    %v24 = vld [vmem:[%s1 + $0x18] sm:$0xff]
    %v25 = vld [vmem:[%s0] sm:$0xff]
    %v26 = vld [vmem:[%s0 + $0x8] sm:$0xff]
    %v27 = vld [vmem:[%s2] sm:$0xff]
    %v28 = vld [vmem:[%s2 + $0x8] sm:$0xff]
    %v29 = vld [vmem:[%s2 + $0x10] sm:$0xff]
    %v30 = vld [vmem:[%s2 + $0x18] sm:$0xff]
    %32 = vset.pattern.permute.xlu0 0
    %33 = vperm.xlu0 %32, %v27
    %v34 = vpop.permute.xlu0 %33
    %37 = vset.pattern.permute.xlu0 0
    %38 = vperm.xlu0 %37, %v28
    %v39 = vpop.permute.xlu0 %38
    %42 = vset.pattern.permute.xlu0 0
    %43 = vperm.xlu0 %42, %v29
    %v44 = vpop.permute.xlu0 %43
    %47 = vset.pattern.permute.xlu0 0
    %48 = vperm.xlu0 %47, %v30
    %v49 = vpop.permute.xlu0 %48
    %vm51 = vcmask 130048
    %v53 = vsel %vm51, %v21, 0
    %v56 = vsel %vm51, %v22, 0
    %v59 = vsel %vm51, %v23, 0
    %v62 = vsel %vm51, %v24, 0
    %64 = vmatprep.subr.mxu0 0.0
    %65 = vmatpush1.msra.mxu0 0.0
    %66 = vmatprep.subr.mxu0 0.0
    %67 = vmatpush1.msra.mxu0 0.0
    %68 = vmatprep.subr.mxu0 0.0
    %69 = vmatpush1.msra.mxu0 0.0
    %70 = vmatprep.subr.mxu0 0.0
    %71 = vmatpush1.msra.mxu0 0.0
    %72 = vmatprep.subr.mxu0 0.0
    %73 = vmatpush1.msra.mxu0 0.0
    %74 = vmatprep.subr.mxu0 0.0
    %75 = vmatpush1.msra.mxu0 0.0
    %76 = vmatprep.subr.mxu0 0.0
    %77 = vmatpush1.msra.mxu0 0.0
    %78 = vmatprep.subr.mxu0 0.0
    %79 = vmatpush1.msra.mxu0 0.0
    %80 = vmatprep.subr.mxu0 0.0
    %81 = vmatpush1.msra.mxu0 0.0
    %82 = vmatprep.subr.mxu0 0.0
    %83 = vmatpush1.msra.mxu0 0.0
    %84 = vmatprep.subr.mxu0 0.0
    %85 = vmatpush1.msra.mxu0 0.0
    %86 = vmatprep.subr.mxu0 0.0
    %87 = vmatpush1.msra.mxu0 0.0
    %88 = vmatprep.subr.mxu0 0.0
    %89 = vmatpush1.msra.mxu0 0.0
    %90 = vmatprep.subr.mxu0 0.0
    %91 = vmatpush1.msra.mxu0 0.0
    %92 = vmatprep.subr.mxu0 0.0
    %93 = vmatpush1.msra.mxu0 %v26
    %94 = vmatprep.subr.mxu0 0.0
    %95 = vmatpush1.msra.mxu0 %v25
    %96 = vmatprep.subr.mxu0 0.0
    %97 = vmatpush2.msra.mxu0 0.0
    %98 = vmatprep.subr.mxu0 0.0
    %99 = vmatpush2.msra.mxu0 0.0
    %100 = vmatprep.subr.mxu0 0.0
    %101 = vmatpush2.msra.mxu0 0.0
    %102 = vmatprep.subr.mxu0 0.0
    %103 = vmatpush2.msra.mxu0 0.0
    %104 = vmatprep.subr.mxu0 0.0
    %105 = vmatpush2.msra.mxu0 0.0
    %106 = vmatprep.subr.mxu0 0.0
    %107 = vmatpush2.msra.mxu0 0.0
    %108 = vmatprep.subr.mxu0 0.0
    %109 = vmatpush2.msra.mxu0 0.0
    %110 = vmatprep.subr.mxu0 0.0
    %111 = vmatpush2.msra.mxu0 0.0
    %112 = vmatprep.subr.mxu0 0.0
    %113 = vmatpush2.msra.mxu0 0.0
    %114 = vmatprep.subr.mxu0 0.0
    %115 = vmatpush2.msra.mxu0 0.0
    %116 = vmatprep.subr.mxu0 0.0
    %117 = vmatpush2.msra.mxu0 0.0
    %118 = vmatprep.subr.mxu0 0.0
    %119 = vmatpush2.msra.mxu0 0.0
    %120 = vmatprep.subr.mxu0 0.0
    %121 = vmatpush2.msra.mxu0 0.0
    %122 = vmatprep.subr.mxu0 0.0
    %123 = vmatpush2.msra.mxu0 0.0
    %124 = vmatprep.subr.mxu0 0.0
    %125 = vmatpush2.msra.mxu0 0.0
    %126 = vmatprep.subr.mxu0 0.0
    %127 = vmatpush2.msra.mxu0 0.0
    %128 = vmatprep.mubr.f32.mxu0 0.0
    %129 = vmatmul.mubr.f32.gmra.mxu0 %v53
    %v130 = vpop.f32.mrf.mxu0
    %v131 = vadd.f32 %v34, %v130
    %v132 = vpop.f32.mrf.mxu0
    %133 = vmatprep.mubr.f32.mxu0 0.0
    %134 = vmatmul.mubr.f32.gmra.mxu0 %v56
    %v135 = vpop.f32.mrf.mxu0
    %v136 = vadd.f32 %v39, %v135
    %v137 = vpop.f32.mrf.mxu0
    %138 = vmatprep.mubr.f32.mxu0 0.0
    %139 = vmatmul.mubr.f32.gmra.mxu0 %v59
    %v140 = vpop.f32.mrf.mxu0
    %v141 = vadd.f32 %v44, %v140
    %v142 = vpop.f32.mrf.mxu0
    %143 = vmatprep.mubr.f32.mxu0 0.0
    %144 = vmatmul.mubr.f32.gmra.mxu0 %v62
    %v145 = vpop.f32.mrf.mxu0
    %v146 = vadd.f32 %v49, %v145
    %v147 = vpop.f32.mrf.mxu0
    %148 = vdwg.mxu0
    %v149 = vmax.f32 %v131, 0.0
    %v150 = vmax.f32 %v136, 0.0
    %v151 = vmax.f32 %v141, 0.0
    %v152 = vmax.f32 %v146, 0.0
    %v153 = vld [vmem:[%s3] sm:$0xf]
    %v154 = vld [vmem:[%s4] sm:$0xf]
    %156 = vset.pattern.permute.xlu0 0
    %157 = vperm.xlu0 %156, %v154
    %v158 = vpop.permute.xlu0 %157
    %vm160 = vcmask 261120
    %v162 = vsel %vm160, %v153, 0
    %164 = vmatprep.subr.mxu0 0.0
    %165 = vmatpush1.msra.mxu0 0.0
    %166 = vmatprep.subr.mxu0 0.0
    %167 = vmatpush1.msra.mxu0 0.0
    %168 = vmatprep.subr.mxu0 0.0
    %169 = vmatpush1.msra.mxu0 0.0
    %170 = vmatprep.subr.mxu0 0.0
    %171 = vmatpush1.msra.mxu0 0.0
    %172 = vmatprep.subr.mxu0 0.0
    %173 = vmatpush1.msra.mxu0 0.0
    %174 = vmatprep.subr.mxu0 0.0
    %175 = vmatpush1.msra.mxu0 0.0
    %176 = vmatprep.subr.mxu0 0.0
    %177 = vmatpush1.msra.mxu0 0.0
    %178 = vmatprep.subr.mxu0 0.0
    %179 = vmatpush1.msra.mxu0 0.0
    %180 = vmatprep.subr.mxu0 0.0
    %181 = vmatpush1.msra.mxu0 0.0
    %182 = vmatprep.subr.mxu0 0.0
    %183 = vmatpush1.msra.mxu0 0.0
    %184 = vmatprep.subr.mxu0 0.0
    %185 = vmatpush1.msra.mxu0 0.0
    %186 = vmatprep.subr.mxu0 0.0
    %187 = vmatpush1.msra.mxu0 0.0
    %188 = vmatprep.subr.mxu0 0.0
    %189 = vmatpush1.msra.mxu0 %v152
    %190 = vmatprep.subr.mxu0 0.0
    %191 = vmatpush1.msra.mxu0 %v151
    %192 = vmatprep.subr.mxu0 0.0
    %193 = vmatpush1.msra.mxu0 %v150
    %194 = vmatprep.subr.mxu0 0.0
    %195 = vmatpush1.msra.mxu0 %v149
    %196 = vmatprep.subr.mxu0 0.0
    %197 = vmatpush2.msra.mxu0 0.0
    %198 = vmatprep.subr.mxu0 0.0
    %199 = vmatpush2.msra.mxu0 0.0
    %200 = vmatprep.subr.mxu0 0.0
    %201 = vmatpush2.msra.mxu0 0.0
    %202 = vmatprep.subr.mxu0 0.0
    %203 = vmatpush2.msra.mxu0 0.0
    %204 = vmatprep.subr.mxu0 0.0
    %205 = vmatpush2.msra.mxu0 0.0
    %206 = vmatprep.subr.mxu0 0.0
    %207 = vmatpush2.msra.mxu0 0.0
    %208 = vmatprep.subr.mxu0 0.0
    %209 = vmatpush2.msra.mxu0 0.0
    %210 = vmatprep.subr.mxu0 0.0
    %211 = vmatpush2.msra.mxu0 0.0
    %212 = vmatprep.subr.mxu0 0.0
    %213 = vmatpush2.msra.mxu0 0.0
    %214 = vmatprep.subr.mxu0 0.0
    %215 = vmatpush2.msra.mxu0 0.0
    %216 = vmatprep.subr.mxu0 0.0
    %217 = vmatpush2.msra.mxu0 0.0
    %218 = vmatprep.subr.mxu0 0.0
    %219 = vmatpush2.msra.mxu0 0.0
    %220 = vmatprep.subr.mxu0 0.0
    %221 = vmatpush2.msra.mxu0 0.0
    %222 = vmatprep.subr.mxu0 0.0
    %223 = vmatpush2.msra.mxu0 0.0
    %224 = vmatprep.subr.mxu0 0.0
    %225 = vmatpush2.msra.mxu0 0.0
    %226 = vmatprep.subr.mxu0 0.0
    %227 = vmatpush2.msra.mxu0 0.0
    %228 = vmatprep.mubr.f32.mxu0 0.0
    %229 = vmatmul.mubr.f32.gmra.mxu0 %v162
    %v230 = vpop.f32.mrf.mxu0
    %v231 = vadd.f32 %v158, %v230
    %v232 = vpop.f32.mrf.mxu0
    %233 = vdwg.mxu0
    %vm234 = vcmask 60416
    %235 = vst.msk [vmem:[#allocation2] sm:$0xf] %vm234, %v231
    // Predicated region
    $region22: #{tpu_custom_call.1} parent=1 // pred_check
      _
    $region23: #{tpu_custom_call.1} parent=1 // pred_check_branch
      %237 = sbr.rel (0) target = $region25
    $region24: #{tpu_custom_call.1} parent=1 // pred_region
      %s239 = ssub.s32 64, 64
      %240 = vsyncadd [#allocation3], %s239
      %s242 = sshll.u32 [#allocation2], 4
      %s243 = int_to_ptr.vmem [resolvable:$true] %s242
      %245 = dma.vmem_to_hbm [thread:$0]  %s243, 64, %s5, [#allocation3]
    $region25: #{tpu_custom_call.1} parent=1 // pred_fallthru
      _
    // Predicated region
    $region26: #{tpu_custom_call.1} parent=1 // pred_check
      _
    $region27: #{tpu_custom_call.1} parent=1 // pred_check_branch
      %247 = sbr.rel (0) target = $region29
    $region28: #{tpu_custom_call.1} parent=1 // pred_region
      %248 = dma.done [#allocation3], 64
    $region29: #{tpu_custom_call.1} parent=1 // pred_fallthru
      _
    %249 = vsyncpa [#allocation3], 1

</llo_original>
